<compile_context>
chip_gen: v7x
topology: tpu7x:2x2x1
jax: 0.10.0
libtpu: 0.0.40
codegen_flags: <defaults>
</compile_context>

<pallas_src>
import functools

import jax
import jax.numpy as jnp
import numpy as np
from jax.experimental import pallas as pl
from jax.experimental.pallas import tpu as pltpu


def _dsb_kernel(xcol_ref, dww_ref, g1_ref, b1_ref, pww_ref, g2_ref, b2_ref,
                out_ref, *, inv_n, c, n_slabs, fold):
    """Fused depthwise-conv -> BN -> ReLU -> pointwise-conv -> BN -> ReLU.

    xcol_ref: (n_slabs, R, P) f32 VMEM  (im2col taps; R = 2C when packed, else C)
    dww_ref:  (n_slabs, R, 1) f32 VMEM  (matching depthwise 3x3 weights)
    g1/b1:    (C, 1)          f32 VMEM  (BN1 gamma / beta)
    pww_ref:  (Cout, C)       f32 VMEM  (pointwise 1x1 weights, MXU operand)
    g2/b2:    (Cout, 1)       f32 VMEM  (BN2 gamma / beta)
    out_ref:  (Cout, P)       f32 VMEM  (lane-dense output slab, unmasked stores)
    """
    eps = 1e-5

    def bn_relu(v, gamma, beta, nch):
        # Train-mode BatchNorm + ReLU folded to y = max(v*s + t, 0).
        # One stacked lane reduction yields sum and sum-of-squares together.
        stats = jnp.sum(jnp.concatenate([v, v * v], axis=0),
                        axis=-1, keepdims=True) * inv_n            # (2*nch, 1)
        mean = stats[:nch]
        var = jnp.maximum(stats[nch:] - mean * mean, 0.0)          # clamp cancellation
        s = gamma * jax.lax.rsqrt(var + eps)                       # (nch, 1) on EUP
        t = beta - mean * s
        return jnp.maximum(v * s + t, 0.0)

    # ---- depthwise 3x3: n_slabs lane-dense FMAs on full-width vregs -----------
    acc = xcol_ref[0] * dww_ref[0]
    for tap in range(1, n_slabs):                                  # short fixed unroll
        acc = acc + xcol_ref[tap] * dww_ref[tap]
    if fold:
        # Taps were packed pairwise on the sublane axis: fold the two C-row
        # halves with one XLU sublane rotation + add, keep the first C rows.
        acc = acc + pltpu.roll(acc, shift=c, axis=0)
        acc = acc[:c, :]
    # NOTE: conv biases are intentionally absent — train-mode BN cancels them.

    h = bn_relu(acc, g1_ref[...], b1_ref[...], c)                  # (C, P)

    # ---- pointwise 1x1 conv on the MXU (the right unit at production Cout/C) --
    z = jnp.dot(pww_ref[...], h, preferred_element_type=jnp.float32)   # (Cout, P)
    out_ref[...] = bn_relu(z, g2_ref[...], b2_ref[...], pww_ref.shape[0])


@functools.partial(jax.jit, static_argnames=("dw_stride",))
def depthwise_separable_block(x, params, *, dw_stride=1):
    """Layout plumbing (pad + im2col + tap packing) + one fused pallas_call."""
    N, C, H, W = x.shape
    Cout = params["pw_w"].shape[0]
    # Conv2d(kernel_size=3, stride=s, padding=1):
    Ho = (H + 2 - 3) // dw_stride + 1
    Wo = (W + 2 - 3) // dw_stride + 1
    P = N * Ho * Wo                                    # lane-dense pixel axis (512 here)

    f32 = jnp.float32
    xpad = jnp.pad(x.astype(f32), ((0, 0), (0, 0), (1, 1), (1, 1)))
    xpad = jnp.transpose(xpad, (1, 0, 2, 3))           # (C, N, H+2, W+2)
    # im2col: one lane-dense (C, P) slab per 3x3 tap; any stride is applied here
    # (outside the kernel) so the kernel never does lane-strided reads.
    taps = [
        xpad[:, :,
             di:di + (Ho - 1) * dw_stride + 1:dw_stride,
             dj:dj + (Wo - 1) * dw_stride + 1:dw_stride].reshape(C, P)
        for di in range(3) for dj in range(3)
    ]
    xcol = jnp.stack(taps, axis=0)                                 # (9, C, P)
    wdw = params["dw_w"].astype(f32).reshape(C, 9).T               # (9, C)

    fold = (2 * C == 8)    # pairwise sublane packing only when it fills a vreg
    if fold:
        # Pack taps (2t, 2t+1) into one 8-sublane slab; pad tap 9 with zeros.
        xcol = jnp.concatenate([xcol, jnp.zeros((1, C, P), f32)], axis=0)
        xcol = xcol.reshape(5, 2 * C, P)                           # (5, 8, P)
        wdw = jnp.concatenate([wdw, jnp.zeros((1, C), f32)], axis=0)
        wdw = wdw.reshape(5, 2 * C, 1)                             # (5, 8, 1)
    else:
        wdw = wdw[:, :, None]                                      # (9, C, 1)
    n_slabs = xcol.shape[0]

    # Depthwise / pointwise conv biases are NOT passed to the kernel: train-mode
    # BN's mean subtraction cancels a per-channel bias exactly.
    g1 = params["g1"].astype(f32)[:, None]                         # (C, 1)
    b1 = params["b1"].astype(f32)[:, None]
    pww = params["pw_w"].astype(f32).reshape(Cout, C)              # (Cout, C)
    g2 = params["g2"].astype(f32)[:, None]                         # (Cout, 1)
    b2 = params["b2"].astype(f32)[:, None]

    cost = pl.CostEstimate(
        flops=int(2 * xcol.size + 2 * Cout * C * P + 8 * (C + Cout) * P),
        transcendentals=int(C + Cout),
        bytes_accessed=int(4 * (xcol.size + wdw.size + pww.size
                                + 4 * (C + Cout) + Cout * P)))

    vmem = pl.BlockSpec(memory_space=pltpu.MemorySpace.VMEM)
    kernel = functools.partial(_dsb_kernel, inv_n=1.0 / P, c=C,
                               n_slabs=n_slabs, fold=fold)
    out_flat = pl.pallas_call(
        kernel,
        out_shape=jax.ShapeDtypeStruct((Cout, P), jnp.float32),
        in_specs=[vmem] * 7,
        out_specs=vmem,
        cost_estimate=cost,
    )(xcol, wdw, g1, b1, pww, g2, b2)

    # Layout plumbing back to the PyTorch NCHW output shape.
    return jnp.transpose(out_flat.reshape(Cout, N, Ho, Wo), (1, 0, 2, 3))


# ---------------------------- pure-JAX reference --------------------------------
def _bn_train(y, gamma, beta, eps=1e-5):
    mean = jnp.mean(y, axis=(0, 2, 3), keepdims=True)
    var = jnp.mean((y - mean) ** 2, axis=(0, 2, 3), keepdims=True)
    return (y - mean) * jax.lax.rsqrt(var + eps) * gamma[None, :, None, None] \
        + beta[None, :, None, None]


def reference(x, p, dw_stride=1):
    dn = ("NCHW", "OIHW", "NCHW")
    y = jax.lax.conv_general_dilated(
        x, p["dw_w"], (dw_stride, dw_stride), [(1, 1), (1, 1)],
        dimension_numbers=dn, feature_group_count=x.shape[1])
    y = y + p["dw_b"][None, :, None, None]
    y = jnp.maximum(_bn_train(y, p["g1"], p["b1"]), 0.0)
    y = jax.lax.conv_general_dilated(y, p["pw_w"], (1, 1), "VALID",
                                     dimension_numbers=dn)
    y = y + p["pw_b"][None, :, None, None]
    y = jnp.maximum(_bn_train(y, p["g2"], p["b2"]), 0.0)
    return y


if __name__ == "__main__":
    N, C, H, W = 2, 4, 16, 16     # batch=2, in_channels=4, spatial=16
    Cout = 8                      # point_out
    dw_stride = 1

    key = jax.random.PRNGKey(0)
    k0, k1, k2, k3, k4 = jax.random.split(key, 5)
    params = {
        "dw_w": jax.random.normal(k0, (C, 1, 3, 3), jnp.float32) * 0.2,
        "dw_b": jax.random.normal(k1, (C,), jnp.float32) * 0.1,
        "pw_w": jax.random.normal(k2, (Cout, C, 1, 1), jnp.float32) * 0.2,
        "pw_b": jax.random.normal(k3, (Cout,), jnp.float32) * 0.1,
        # PyTorch BatchNorm2d default init: gamma=1, beta=0
        "g1": jnp.ones((C,), jnp.float32), "b1": jnp.zeros((C,), jnp.float32),
        "g2": jnp.ones((Cout,), jnp.float32), "b2": jnp.zeros((Cout,), jnp.float32),
    }
    x = jax.random.normal(k4, (N, C, H, W), jnp.float32)

    out = depthwise_separable_block(x, params, dw_stride=dw_stride)
    out = jax.block_until_ready(out)

    ref = jax.block_until_ready(reference(x, params, dw_stride=dw_stride))
    assert out.shape == ref.shape, (out.shape, ref.shape)
    np.testing.assert_allclose(np.asarray(out), np.asarray(ref),
                               rtol=1e-4, atol=1e-4)
    print("KERNEL_OK")
</pallas_src>

<mosaic_0001>
module attributes {stable_mosaic.version = 11 : i64} {
  func.func @_dsb_kernel(%arg0: memref<5x8x512xf32, #tpu.memory_space<vmem>>, %arg1: memref<5x8x1xf32, #tpu.memory_space<vmem>>, %arg2: memref<4x1xf32, #tpu.memory_space<vmem>>, %arg3: memref<4x1xf32, #tpu.memory_space<vmem>>, %arg4: memref<8x4xf32, #tpu.memory_space<vmem>>, %arg5: memref<8x1xf32, #tpu.memory_space<vmem>>, %arg6: memref<8x1xf32, #tpu.memory_space<vmem>>, %arg7: memref<8x512xf32, #tpu.memory_space<vmem>>) attributes {dimension_semantics = [], scalar_prefetch = 0 : i64, scratch_operands = 0 : i64, tpu.core_type = #tpu.core_type<tc>} {
    %c0 = arith.constant 0 : index
    %c0_0 = arith.constant 0 : index
    %c0_1 = arith.constant 0 : index
    %0 = vector.load %arg0[%c0, %c0_0, %c0_1] : memref<5x8x512xf32, #tpu.memory_space<vmem>>, vector<1x8x512xf32>
    %1 = vector.shape_cast %0 : vector<1x8x512xf32> to vector<8x512xf32>
    %c0_2 = arith.constant 0 : index
    %c0_3 = arith.constant 0 : index
    %c0_4 = arith.constant 0 : index
    %2 = vector.load %arg1[%c0_2, %c0_3, %c0_4] : memref<5x8x1xf32, #tpu.memory_space<vmem>>, vector<1x8x1xf32>
    %3 = vector.shape_cast %2 : vector<1x8x1xf32> to vector<8x1xf32>
    %4 = vector.broadcast %3 : vector<8x1xf32> to vector<8x512xf32>
    %5 = arith.mulf %1, %4 : vector<8x512xf32>
    %c1 = arith.constant 1 : index
    %c0_5 = arith.constant 0 : index
    %c0_6 = arith.constant 0 : index
    %6 = vector.load %arg0[%c1, %c0_5, %c0_6] : memref<5x8x512xf32, #tpu.memory_space<vmem>>, vector<1x8x512xf32>
    %7 = vector.shape_cast %6 : vector<1x8x512xf32> to vector<8x512xf32>
    %c1_7 = arith.constant 1 : index
    %c0_8 = arith.constant 0 : index
    %c0_9 = arith.constant 0 : index
    %8 = vector.load %arg1[%c1_7, %c0_8, %c0_9] : memref<5x8x1xf32, #tpu.memory_space<vmem>>, vector<1x8x1xf32>
    %9 = vector.shape_cast %8 : vector<1x8x1xf32> to vector<8x1xf32>
    %10 = vector.broadcast %9 : vector<8x1xf32> to vector<8x512xf32>
    %11 = arith.mulf %7, %10 : vector<8x512xf32>
    %12 = arith.addf %5, %11 : vector<8x512xf32>
    %c2 = arith.constant 2 : index
    %c0_10 = arith.constant 0 : index
    %c0_11 = arith.constant 0 : index
    %13 = vector.load %arg0[%c2, %c0_10, %c0_11] : memref<5x8x512xf32, #tpu.memory_space<vmem>>, vector<1x8x512xf32>
    %14 = vector.shape_cast %13 : vector<1x8x512xf32> to vector<8x512xf32>
    %c2_12 = arith.constant 2 : index
    %c0_13 = arith.constant 0 : index
    %c0_14 = arith.constant 0 : index
    %15 = vector.load %arg1[%c2_12, %c0_13, %c0_14] : memref<5x8x1xf32, #tpu.memory_space<vmem>>, vector<1x8x1xf32>
    %16 = vector.shape_cast %15 : vector<1x8x1xf32> to vector<8x1xf32>
    %17 = vector.broadcast %16 : vector<8x1xf32> to vector<8x512xf32>
    %18 = arith.mulf %14, %17 : vector<8x512xf32>
    %19 = arith.addf %12, %18 : vector<8x512xf32>
    %c3 = arith.constant 3 : index
    %c0_15 = arith.constant 0 : index
    %c0_16 = arith.constant 0 : index
    %20 = vector.load %arg0[%c3, %c0_15, %c0_16] : memref<5x8x512xf32, #tpu.memory_space<vmem>>, vector<1x8x512xf32>
    %21 = vector.shape_cast %20 : vector<1x8x512xf32> to vector<8x512xf32>
    %c3_17 = arith.constant 3 : index
    %c0_18 = arith.constant 0 : index
    %c0_19 = arith.constant 0 : index
    %22 = vector.load %arg1[%c3_17, %c0_18, %c0_19] : memref<5x8x1xf32, #tpu.memory_space<vmem>>, vector<1x8x1xf32>
    %23 = vector.shape_cast %22 : vector<1x8x1xf32> to vector<8x1xf32>
    %24 = vector.broadcast %23 : vector<8x1xf32> to vector<8x512xf32>
    %25 = arith.mulf %21, %24 : vector<8x512xf32>
    %26 = arith.addf %19, %25 : vector<8x512xf32>
    %c4 = arith.constant 4 : index
    %c0_20 = arith.constant 0 : index
    %c0_21 = arith.constant 0 : index
    %27 = vector.load %arg0[%c4, %c0_20, %c0_21] : memref<5x8x512xf32, #tpu.memory_space<vmem>>, vector<1x8x512xf32>
    %28 = vector.shape_cast %27 : vector<1x8x512xf32> to vector<8x512xf32>
    %c4_22 = arith.constant 4 : index
    %c0_23 = arith.constant 0 : index
    %c0_24 = arith.constant 0 : index
    %29 = vector.load %arg1[%c4_22, %c0_23, %c0_24] : memref<5x8x1xf32, #tpu.memory_space<vmem>>, vector<1x8x1xf32>
    %30 = vector.shape_cast %29 : vector<1x8x1xf32> to vector<8x1xf32>
    %31 = vector.broadcast %30 : vector<8x1xf32> to vector<8x512xf32>
    %32 = arith.mulf %28, %31 : vector<8x512xf32>
    %33 = arith.addf %26, %32 : vector<8x512xf32>
    %c4_i32 = arith.constant 4 : i32
    %34 = tpu.dynamic_rotate %33 by %c4_i32 dim 0 : vector<8x512xf32>, i32 -> vector<8x512xf32>
    %35 = arith.addf %33, %34 : vector<8x512xf32>
    %36 = vector.extract_strided_slice %35 {offsets = [0, 0], sizes = [4, 512], strides = [1, 1]} : vector<8x512xf32> to vector<4x512xf32>
    %c0_25 = arith.constant 0 : index
    %c0_26 = arith.constant 0 : index
    %37 = vector.load %arg2[%c0_25, %c0_26] : memref<4x1xf32, #tpu.memory_space<vmem>>, vector<4x1xf32>
    %c0_27 = arith.constant 0 : index
    %c0_28 = arith.constant 0 : index
    %38 = vector.load %arg3[%c0_27, %c0_28] : memref<4x1xf32, #tpu.memory_space<vmem>>, vector<4x1xf32>
    %39 = arith.mulf %36, %36 : vector<4x512xf32>
    %40 = tpu.concatenate %36, %39 in 0 : vector<4x512xf32>, vector<4x512xf32> -> vector<8x512xf32>
    %cst = arith.constant dense<0.000000e+00> : vector<8xf32>
    %41 = vector.multi_reduction <add>, %40, %cst [1] : vector<8x512xf32> to vector<8xf32>
    %42 = vector.shape_cast %41 : vector<8xf32> to vector<8x1xf32>
    %cst_29 = arith.constant 0.001953125 : f32
    %43 = vector.broadcast %cst_29 : f32 to vector<8x1xf32>
    %44 = arith.mulf %42, %43 : vector<8x1xf32>
    %45 = vector.extract_strided_slice %44 {offsets = [0, 0], sizes = [4, 1], strides = [1, 1]} : vector<8x1xf32> to vector<4x1xf32>
    %46 = vector.extract_strided_slice %44 {offsets = [4, 0], sizes = [4, 1], strides = [1, 1]} : vector<8x1xf32> to vector<4x1xf32>
    %47 = arith.mulf %45, %45 : vector<4x1xf32>
    %48 = arith.subf %46, %47 : vector<4x1xf32>
    %cst_30 = arith.constant 0.000000e+00 : f32
    %49 = vector.broadcast %cst_30 : f32 to vector<4x1xf32>
    %50 = arith.maximumf %48, %49 : vector<4x1xf32>
    %cst_31 = arith.constant 9.99999974E-6 : f32
    %51 = vector.broadcast %cst_31 : f32 to vector<4x1xf32>
    %52 = arith.addf %50, %51 : vector<4x1xf32>
    %53 = math.rsqrt %52 : vector<4x1xf32>
    %54 = arith.mulf %37, %53 : vector<4x1xf32>
    %55 = arith.mulf %45, %54 : vector<4x1xf32>
    %56 = arith.subf %38, %55 : vector<4x1xf32>
    %57 = vector.broadcast %54 : vector<4x1xf32> to vector<4x512xf32>
    %58 = arith.mulf %36, %57 : vector<4x512xf32>
    %59 = vector.broadcast %56 : vector<4x1xf32> to vector<4x512xf32>
    %60 = arith.addf %58, %59 : vector<4x512xf32>
    %cst_32 = arith.constant 0.000000e+00 : f32
    %61 = vector.broadcast %cst_32 : f32 to vector<4x512xf32>
    %62 = arith.maximumf %60, %61 : vector<4x512xf32>
    %c0_33 = arith.constant 0 : index
    %c0_34 = arith.constant 0 : index
    %63 = vector.load %arg4[%c0_33, %c0_34] : memref<8x4xf32, #tpu.memory_space<vmem>>, vector<8x4xf32>
    %cst_35 = arith.constant dense<0.000000e+00> : vector<8x512xf32>
    %64 = tpu.matmul %63, %62, %cst_35 {dimension_numbers = #tpu.dot_dimension_numbers<[1], [0], [0], [1], [0, 0, 1, 1], [], []>} : vector<8x4xf32>, vector<4x512xf32>, vector<8x512xf32> -> vector<8x512xf32>
    %c0_36 = arith.constant 0 : index
    %c0_37 = arith.constant 0 : index
    %65 = vector.load %arg5[%c0_36, %c0_37] : memref<8x1xf32, #tpu.memory_space<vmem>>, vector<8x1xf32>
    %c0_38 = arith.constant 0 : index
    %c0_39 = arith.constant 0 : index
    %66 = vector.load %arg6[%c0_38, %c0_39] : memref<8x1xf32, #tpu.memory_space<vmem>>, vector<8x1xf32>
    %67 = arith.mulf %64, %64 : vector<8x512xf32>
    %68 = tpu.concatenate %64, %67 in 0 : vector<8x512xf32>, vector<8x512xf32> -> vector<16x512xf32>
    %cst_40 = arith.constant dense<0.000000e+00> : vector<16xf32>
    %69 = vector.multi_reduction <add>, %68, %cst_40 [1] : vector<16x512xf32> to vector<16xf32>
    %70 = vector.shape_cast %69 : vector<16xf32> to vector<16x1xf32>
    %cst_41 = arith.constant 0.001953125 : f32
    %71 = vector.broadcast %cst_41 : f32 to vector<16x1xf32>
    %72 = arith.mulf %70, %71 : vector<16x1xf32>
    %73 = vector.extract_strided_slice %72 {offsets = [0, 0], sizes = [8, 1], strides = [1, 1]} : vector<16x1xf32> to vector<8x1xf32>
    %74 = vector.extract_strided_slice %72 {offsets = [8, 0], sizes = [8, 1], strides = [1, 1]} : vector<16x1xf32> to vector<8x1xf32>
    %75 = arith.mulf %73, %73 : vector<8x1xf32>
    %76 = arith.subf %74, %75 : vector<8x1xf32>
    %cst_42 = arith.constant 0.000000e+00 : f32
    %77 = vector.broadcast %cst_42 : f32 to vector<8x1xf32>
    %78 = arith.maximumf %76, %77 : vector<8x1xf32>
    %cst_43 = arith.constant 9.99999974E-6 : f32
    %79 = vector.broadcast %cst_43 : f32 to vector<8x1xf32>
    %80 = arith.addf %78, %79 : vector<8x1xf32>
    %81 = math.rsqrt %80 : vector<8x1xf32>
    %82 = arith.mulf %65, %81 : vector<8x1xf32>
    %83 = arith.mulf %73, %82 : vector<8x1xf32>
    %84 = arith.subf %66, %83 : vector<8x1xf32>
    %85 = vector.broadcast %82 : vector<8x1xf32> to vector<8x512xf32>
    %86 = arith.mulf %64, %85 : vector<8x512xf32>
    %87 = vector.broadcast %84 : vector<8x1xf32> to vector<8x512xf32>
    %88 = arith.addf %86, %87 : vector<8x512xf32>
    %cst_44 = arith.constant 0.000000e+00 : f32
    %89 = vector.broadcast %cst_44 : f32 to vector<8x512xf32>
    %90 = arith.maximumf %88, %89 : vector<8x512xf32>
    %c0_45 = arith.constant 0 : index
    %c0_46 = arith.constant 0 : index
    %91 = vector.load %arg7[%c0_45, %c0_46] : memref<8x512xf32, #tpu.memory_space<vmem>>, vector<8x512xf32>
    tpu.vector_store %arg7[%c0_45, %c0_46], %90 {strides = array<i32>} : memref<8x512xf32, #tpu.memory_space<vmem>>, vector<8x512xf32>,
    return
  }
}

</mosaic_0001>

<llo_original>
// kernel: depthwise_separable_block.1
$region0: #{depthwise_separable_block.1}
  #allocation0 [shape = 'u32[]', space=smem, size = 0x4, offset = 0x4, fixed_abs, tag = 'smem constant byte address 0x4 - core index']
  #allocation1 [shape = 'u32[144,128]{1,0:T(1,128)}', space=vmem, size = 0x12000, scoped, tag = 'internal scratch']
  %s0 = inlined_call_operand.vmem [shape: f32[5,8,512], index: 0, kind: input, shape index: {}]
  %s1 = inlined_call_operand.vmem [shape: f32[5,8,1], index: 1, kind: input, shape index: {}]
  %s2 = inlined_call_operand.vmem [shape: f32[4,1], index: 2, kind: input, shape index: {}]
  %s3 = inlined_call_operand.vmem [shape: f32[4,1], index: 3, kind: input, shape index: {}]
  %s4 = inlined_call_operand.vmem [shape: f32[8,4], index: 4, kind: input, shape index: {}]
  %s5 = inlined_call_operand.vmem [shape: f32[8,1], index: 5, kind: input, shape index: {}]
  %s6 = inlined_call_operand.vmem [shape: f32[8,1], index: 6, kind: input, shape index: {}]
  %s7 = inlined_call_operand.vmem [shape: f32[8,512], index: 7, kind: output, shape index: {}]
  %s8 = sld [smem:[#allocation0]]
  $region38: #{depthwise_separable_block.1} parent=0
    _
  %s10 = ssub.s32 1, %s8
  %s11 = scalar_select 0, %s10, %s8
  // Predicated region
  $region2: #{depthwise_separable_block.1} parent=0 // pred_check
    _
  $region3: #{depthwise_separable_block.1} parent=0 // pred_check_branch
    %13 = sbr.rel (0) target = $region5
  $region4: #{depthwise_separable_block.1} parent=0 // pred_region
    _
  $region5: #{depthwise_separable_block.1} parent=0 // pred_fallthru
    _
  // Predicated region
  $region6: #{depthwise_separable_block.1} parent=0 // pred_check
    _
  $region7: #{depthwise_separable_block.1} parent=0 // pred_check_branch
    %15 = sbr.rel (0) target = $region9
  $region8: #{depthwise_separable_block.1} parent=0 // pred_region
    _
  $region9: #{depthwise_separable_block.1} parent=0 // pred_fallthru
    _
  // Predicated region
  $region10: #{depthwise_separable_block.1} parent=0 // pred_check
    _
  $region11: #{depthwise_separable_block.1} parent=0 // pred_check_branch
    %17 = sbr.rel (0) target = $region13
  $region12: #{depthwise_separable_block.1} parent=0 // pred_region
    _
  $region13: #{depthwise_separable_block.1} parent=0 // pred_fallthru
    _
  // Predicated region
  $region14: #{depthwise_separable_block.1} parent=0 // pred_check
    _
  $region15: #{depthwise_separable_block.1} parent=0 // pred_check_branch
    %19 = sbr.rel (0) target = $region17
  $region16: #{depthwise_separable_block.1} parent=0 // pred_region
    _
  $region17: #{depthwise_separable_block.1} parent=0 // pred_fallthru
    _
  // Predicated region
  $region18: #{depthwise_separable_block.1} parent=0 // pred_check
    _
  $region19: #{depthwise_separable_block.1} parent=0 // pred_check_branch
    %21 = sbr.rel (0) target = $region21
  $region20: #{depthwise_separable_block.1} parent=0 // pred_region
    _
  $region21: #{depthwise_separable_block.1} parent=0 // pred_fallthru
    _
  // Predicated region
  $region22: #{depthwise_separable_block.1} parent=0 // pred_check
    _
  $region23: #{depthwise_separable_block.1} parent=0 // pred_check_branch
    %23 = sbr.rel (0) target = $region25
  $region24: #{depthwise_separable_block.1} parent=0 // pred_region
    _
  $region25: #{depthwise_separable_block.1} parent=0 // pred_fallthru
    _
  // Predicated region
  $region26: #{depthwise_separable_block.1} parent=0 // pred_check
    _
  $region27: #{depthwise_separable_block.1} parent=0 // pred_check_branch
    %25 = sbr.rel (0) target = $region29
  $region28: #{depthwise_separable_block.1} parent=0 // pred_region
    _
  $region29: #{depthwise_separable_block.1} parent=0 // pred_fallthru
    _
  %v26 = vld [vmem:[%s0] sm:$0xff]
  %v27 = vld [vmem:[%s0 + $0x8] sm:$0xff]
  %v28 = vld [vmem:[%s0 + $0x10] sm:$0xff]
  %v29 = vld [vmem:[%s0 + $0x18] sm:$0xff]
  %v30 = vld [vmem:[%s1] sm:$0xff]
  %32 = vset.pattern.permute.xlu0 0
  %33 = vperm.xlu0 %32, %v30
  %v34 = vpop.permute.xlu0 %33
  %v36 = vmul.f32 %v26, %v34
  %v37 = vmul.f32 %v27, %v34
  %v38 = vmul.f32 %v28, %v34
  %v39 = vmul.f32 %v29, %v34
  %s40 = scalar_lea.vmem %s0, 32
  %v41 = vld [vmem:[%s40] sm:$0xff]
  %v42 = vld [vmem:[%s40 + $0x8] sm:$0xff]
  %v43 = vld [vmem:[%s40 + $0x10] sm:$0xff]
  %v44 = vld [vmem:[%s40 + $0x18] sm:$0xff]
  %s45 = scalar_lea.vmem %s1, 8
  %v46 = vld [vmem:[%s45] sm:$0xff]
  %48 = vset.pattern.permute.xlu0 0
  %49 = vperm.xlu0 %48, %v46
  %v50 = vpop.permute.xlu0 %49
  %v52 = vmul.f32 %v41, %v50
  %v53 = vmul.f32 %v42, %v50
  %v54 = vmul.f32 %v43, %v50
  %v55 = vmul.f32 %v44, %v50
  %v56 = vadd.f32 %v36, %v52
  %v57 = vadd.f32 %v37, %v53
  %v58 = vadd.f32 %v38, %v54
  %v59 = vadd.f32 %v39, %v55
  %s60 = scalar_lea.vmem %s0, 64
  %v61 = vld [vmem:[%s60] sm:$0xff]
  %v62 = vld [vmem:[%s60 + $0x8] sm:$0xff]
  %v63 = vld [vmem:[%s60 + $0x10] sm:$0xff]
  %v64 = vld [vmem:[%s60 + $0x18] sm:$0xff]
  %s65 = scalar_lea.vmem %s1, 16
  %v66 = vld [vmem:[%s65] sm:$0xff]
  %68 = vset.pattern.permute.xlu0 0
  %69 = vperm.xlu0 %68, %v66
  %v70 = vpop.permute.xlu0 %69
  %v72 = vmul.f32 %v61, %v70
  %v73 = vmul.f32 %v62, %v70
  %v74 = vmul.f32 %v63, %v70
  %v75 = vmul.f32 %v64, %v70
  %v76 = vadd.f32 %v56, %v72
  %v77 = vadd.f32 %v57, %v73
  %v78 = vadd.f32 %v58, %v74
  %v79 = vadd.f32 %v59, %v75
  %s80 = scalar_lea.vmem %s0, 96
  %v81 = vld [vmem:[%s80] sm:$0xff]
  %v82 = vld [vmem:[%s80 + $0x8] sm:$0xff]
  %v83 = vld [vmem:[%s80 + $0x10] sm:$0xff]
  %v84 = vld [vmem:[%s80 + $0x18] sm:$0xff]
  %s85 = scalar_lea.vmem %s1, 24
  %v86 = vld [vmem:[%s85] sm:$0xff]
  %88 = vset.pattern.permute.xlu0 0
  %89 = vperm.xlu0 %88, %v86
  %v90 = vpop.permute.xlu0 %89
  %v92 = vmul.f32 %v81, %v90
  %v93 = vmul.f32 %v82, %v90
  %v94 = vmul.f32 %v83, %v90
  %v95 = vmul.f32 %v84, %v90
  %v96 = vadd.f32 %v76, %v92
  %v97 = vadd.f32 %v77, %v93
  %v98 = vadd.f32 %v78, %v94
  %v99 = vadd.f32 %v79, %v95
  %s100 = scalar_lea.vmem %s0, 128
  %v101 = vld [vmem:[%s100] sm:$0xff]
  %v102 = vld [vmem:[%s100 + $0x8] sm:$0xff]
  %v103 = vld [vmem:[%s100 + $0x10] sm:$0xff]
  %v104 = vld [vmem:[%s100 + $0x18] sm:$0xff]
  %s105 = scalar_lea.vmem %s1, 32
  %v106 = vld [vmem:[%s105] sm:$0xff]
  %108 = vset.pattern.permute.xlu0 0
  %109 = vperm.xlu0 %108, %v106
  %v110 = vpop.permute.xlu0 %109
  %v112 = vmul.f32 %v101, %v110
  %v113 = vmul.f32 %v102, %v110
  %v114 = vmul.f32 %v103, %v110
  %v115 = vmul.f32 %v104, %v110
  %v116 = vadd.f32 %v96, %v112
  %v117 = vadd.f32 %v97, %v113
  %v118 = vadd.f32 %v98, %v114
  %v119 = vadd.f32 %v99, %v115
  %v120 = vrot.slane %v116, 4
  %v121 = vrot.slane %v117, 4
  %v122 = vrot.slane %v118, 4
  %v123 = vrot.slane %v119, 4
  %v124 = vadd.f32 %v116, %v120
  %v125 = vadd.f32 %v117, %v121
  %v126 = vadd.f32 %v118, %v122
  %v127 = vadd.f32 %v119, %v123
  %v128 = vld [vmem:[%s2] sm:$0xf]
  %v129 = vld [vmem:[%s3] sm:$0xf]
  %v130 = vmul.f32 %v124, %v124
  %v131 = vmul.f32 %v125, %v125
  %v132 = vmul.f32 %v126, %v126
  %v133 = vmul.f32 %v127, %v127
  %v138 = vrot.slane %v130, 4
  %v139 = vrot.slane %v131, 4
  %v140 = vrot.slane %v132, 4
  %v141 = vrot.slane %v133, 4
  %vm146 = vcmask 1043456
  %v147 = vsel %vm146, %v124, %v138
  %v148 = vsel %vm146, %v125, %v139
  %v149 = vsel %vm146, %v126, %v140
  %v150 = vsel %vm146, %v127, %v141
  %v151 = vadd.f32 %v147, %v148
  %v152 = vadd.f32 %v151, %v149
  %v153 = vadd.f32 %v152, %v150
  %154 = vadd.xlane.f32.xlu0 %v153
  %v155 = vpop.xlane.xlu0 %154
  %v156 = vmul.f32 %v155, 0.001953125
  %v157 = vmul.f32 %v156, %v156
  %v159 = vrot.slane %v157, 4
  %v161 = vsub.f32 %v156, %v159
  %v162 = vmax.f32 %v161, 0.0
  %v163 = vadd.f32 %v162, 1e-05
  %v164 = vrsqrt.pop %v163
  %v166 = vrot.slane %v164, 4
  %v168 = vmul.f32 %v128, %v166
  %v169 = vmul.f32 %v156, %v168
  %v170 = vsub.f32 %v129, %v169
  %172 = vset.pattern.permute.xlu0 0
  %173 = vperm.xlu0 %172, %v168
  %v174 = vpop.permute.xlu0 %173
  %v176 = vmul.f32 %v124, %v174
  %v177 = vmul.f32 %v125, %v174
  %v178 = vmul.f32 %v126, %v174
  %v179 = vmul.f32 %v127, %v174
  %181 = vset.pattern.permute.xlu0 0
  %182 = vperm.xlu0 %181, %v170
  %v183 = vpop.permute.xlu0 %182
  %v185 = vadd.f32 %v176, %v183
  %v186 = vadd.f32 %v177, %v183
  %v187 = vadd.f32 %v178, %v183
  %v188 = vadd.f32 %v179, %v183
  %v189 = vmax.f32 %v185, 0.0
  %v190 = vmax.f32 %v186, 0.0
  %v191 = vmax.f32 %v187, 0.0
  %v192 = vmax.f32 %v188, 0.0
  %v193 = vld [vmem:[%s4] sm:$0xff]
  %vm194 = vcmask 31744
  %v196 = vsel %vm194, %v193, 0
  %v199 = vsel %vm146, %v189, 0
  %v202 = vsel %vm146, %v190, 0
  %v205 = vsel %vm146, %v191, 0
  %v208 = vsel %vm146, %v192, 0
  %210 = vmatprep.subr.mxu0 %v202
  %211 = vmatpush1.msra.mxu0 %v199
  %212 = vmatprep.subr.mxu0 0.0
  %213 = vmatpush1.msra.mxu0 0.0
  %214 = vmatprep.subr.mxu0 0.0
  %215 = vmatpush1.msra.mxu0 0.0
  %216 = vmatprep.subr.mxu0 0.0
  %217 = vmatpush1.msra.mxu0 0.0
  %218 = vmatprep.subr.mxu0 0.0
  %219 = vmatpush1.msra.mxu0 0.0
  %220 = vmatprep.subr.mxu0 0.0
  %221 = vmatpush1.msra.mxu0 0.0
  %222 = vmatprep.subr.mxu0 0.0
  %223 = vmatpush1.msra.mxu0 0.0
  %224 = vmatprep.subr.mxu0 0.0
  %225 = vmatpush1.msra.mxu0 0.0
  %226 = vmatprep.subr.mxu0 0.0
  %227 = vmatpush1.msra.mxu0 0.0
  %228 = vmatprep.subr.mxu0 0.0
  %229 = vmatpush1.msra.mxu0 0.0
  %230 = vmatprep.subr.mxu0 0.0
  %231 = vmatpush1.msra.mxu0 0.0
  %232 = vmatprep.subr.mxu0 0.0
  %233 = vmatpush1.msra.mxu0 0.0
  %234 = vmatprep.subr.mxu0 0.0
  %235 = vmatpush1.msra.mxu0 0.0
  %236 = vmatprep.subr.mxu0 0.0
  %237 = vmatpush1.msra.mxu0 0.0
  %238 = vmatprep.subr.mxu0 0.0
  %239 = vmatpush1.msra.mxu0 0.0
  %240 = vmatprep.subr.mxu0 0.0
  %241 = vmatpush1.msra.mxu0 0.0
  %242 = vmatprep.subr.mxu0 0.0
  %243 = vmatpush1.msra.mxu0 0.0
  %244 = vmatprep.subr.mxu0 0.0
  %245 = vmatpush1.msra.mxu0 0.0
  %246 = vmatprep.subr.mxu0 0.0
  %247 = vmatpush1.msra.mxu0 0.0
  %248 = vmatprep.subr.mxu0 0.0
  %249 = vmatpush1.msra.mxu0 0.0
  %250 = vmatprep.subr.mxu0 0.0
  %251 = vmatpush1.msra.mxu0 0.0
  %252 = vmatprep.subr.mxu0 0.0
  %253 = vmatpush1.msra.mxu0 0.0
  %254 = vmatprep.subr.mxu0 0.0
  %255 = vmatpush1.msra.mxu0 0.0
  %256 = vmatprep.subr.mxu0 0.0
  %257 = vmatpush1.msra.mxu0 0.0
  %258 = vmatprep.subr.mxu0 0.0
  %259 = vmatpush1.msra.mxu0 0.0
  %260 = vmatprep.subr.mxu0 0.0
  %261 = vmatpush1.msra.mxu0 0.0
  %262 = vmatprep.subr.mxu0 0.0
  %263 = vmatpush1.msra.mxu0 0.0
  %264 = vmatprep.subr.mxu0 0.0
  %265 = vmatpush1.msra.mxu0 0.0
  %266 = vmatprep.subr.mxu0 0.0
  %267 = vmatpush1.msra.mxu0 0.0
  %268 = vmatprep.subr.mxu0 0.0
  %269 = vmatpush1.msra.mxu0 0.0
  %270 = vmatprep.subr.mxu0 0.0
  %271 = vmatpush1.msra.mxu0 0.0
  %272 = vmatprep.subr.mxu0 0.0
  %273 = vmatpush1.msra.mxu0 0.0
  %274 = vmatprep.mubr.f32.mxu0 0.0
  %275 = vmatmul.mubr.f32.gmra.mrb[0].mxu0 %v196
  %v276 = vpop.f32.mrb[0].mxu0
  %v277 = vadd.f32 0.0, %v276
  %v278 = vpop.f32.mrb[0].mxu0
  %v279 = vadd.f32 0.0, %v278
  %280 = vdwg.mxu0
  %281 = vmatprep.subr.mxu0 %v208
  %282 = vmatpush1.msra.mxu0 %v205
  %283 = vmatprep.subr.mxu0 0.0
  %284 = vmatpush1.msra.mxu0 0.0
  %285 = vmatprep.subr.mxu0 0.0
  %286 = vmatpush1.msra.mxu0 0.0
  %287 = vmatprep.subr.mxu0 0.0
  %288 = vmatpush1.msra.mxu0 0.0
  %289 = vmatprep.subr.mxu0 0.0
  %290 = vmatpush1.msra.mxu0 0.0
  %291 = vmatprep.subr.mxu0 0.0
  %292 = vmatpush1.msra.mxu0 0.0
  %293 = vmatprep.subr.mxu0 0.0
  %294 = vmatpush1.msra.mxu0 0.0
  %295 = vmatprep.subr.mxu0 0.0
  %296 = vmatpush1.msra.mxu0 0.0
  %297 = vmatprep.subr.mxu0 0.0
  %298 = vmatpush1.msra.mxu0 0.0
  %299 = vmatprep.subr.mxu0 0.0
  %300 = vmatpush1.msra.mxu0 0.0
  %301 = vmatprep.subr.mxu0 0.0
  %302 = vmatpush1.msra.mxu0 0.0
  %303 = vmatprep.subr.mxu0 0.0
  %304 = vmatpush1.msra.mxu0 0.0
  %305 = vmatprep.subr.mxu0 0.0
  %306 = vmatpush1.msra.mxu0 0.0
  %307 = vmatprep.subr.mxu0 0.0
  %308 = vmatpush1.msra.mxu0 0.0
  %309 = vmatprep.subr.mxu0 0.0
  %310 = vmatpush1.msra.mxu0 0.0
  %311 = vmatprep.subr.mxu0 0.0
  %312 = vmatpush1.msra.mxu0 0.0
  %313 = vmatprep.subr.mxu0 0.0
  %314 = vmatpush1.msra.mxu0 0.0
  %315 = vmatprep.subr.mxu0 0.0
  %316 = vmatpush1.msra.mxu0 0.0
  %317 = vmatprep.subr.mxu0 0.0
  %318 = vmatpush1.msra.mxu0 0.0
  %319 = vmatprep.subr.mxu0 0.0
  %320 = vmatpush1.msra.mxu0 0.0
  %321 = vmatprep.subr.mxu0 0.0
  %322 = vmatpush1.msra.mxu0 0.0
  %323 = vmatprep.subr.mxu0 0.0
  %324 = vmatpush1.msra.mxu0 0.0
  %325 = vmatprep.subr.mxu0 0.0
  %326 = vmatpush1.msra.mxu0 0.0
  %327 = vmatprep.subr.mxu0 0.0
  %328 = vmatpush1.msra.mxu0 0.0
  %329 = vmatprep.subr.mxu0 0.0
  %330 = vmatpush1.msra.mxu0 0.0
  %331 = vmatprep.subr.mxu0 0.0
  %332 = vmatpush1.msra.mxu0 0.0
  %333 = vmatprep.subr.mxu0 0.0
  %334 = vmatpush1.msra.mxu0 0.0
  %335 = vmatprep.subr.mxu0 0.0
  %336 = vmatpush1.msra.mxu0 0.0
  %337 = vmatprep.subr.mxu0 0.0
  %338 = vmatpush1.msra.mxu0 0.0
  %339 = vmatprep.subr.mxu0 0.0
  %340 = vmatpush1.msra.mxu0 0.0
  %341 = vmatprep.subr.mxu0 0.0
  %342 = vmatpush1.msra.mxu0 0.0
  %343 = vmatprep.subr.mxu0 0.0
  %344 = vmatpush1.msra.mxu0 0.0
  %345 = vmatprep.mubr.f32.mxu0 0.0
  %346 = vmatmul.mubr.f32.gmra.mrb[0].mxu0 %v196
  %v347 = vpop.f32.mrb[0].mxu0
  %v348 = vadd.f32 0.0, %v347
  %v349 = vpop.f32.mrb[0].mxu0
  %v350 = vadd.f32 0.0, %v349
  %351 = vdwg.mxu0
  %v352 = vld [vmem:[%s5] sm:$0xff]
  %v353 = vld [vmem:[%s6] sm:$0xff]
  %v354 = vmul.f32 %v277, %v277
  %v355 = vmul.f32 %v279, %v279
  %v356 = vmul.f32 %v348, %v348
  %v357 = vmul.f32 %v350, %v350
  %v358 = vadd.f32 %v277, %v279
  %v359 = vadd.f32 %v358, %v348
  %v360 = vadd.f32 %v359, %v350
  %361 = vadd.xlane.f32.xlu0 %v360
  %v362 = vpop.xlane.xlu0 %361
  %v363 = vadd.f32 %v354, %v355
  %v364 = vadd.f32 %v363, %v356
  %v365 = vadd.f32 %v364, %v357
  %366 = vadd.xlane.f32.xlu0 %v365
  %v367 = vpop.xlane.xlu0 %366
  %v368 = vmul.f32 %v362, 0.001953125
  %v369 = vmul.f32 %v367, 0.001953125
  %v370 = vmul.f32 %v368, %v368
  %v371 = vsub.f32 %v369, %v370
  %v372 = vmax.f32 %v371, 0.0
  %v373 = vadd.f32 %v372, 1e-05
  %v374 = vrsqrt.pop %v373
  %v375 = vmul.f32 %v352, %v374
  %v376 = vmul.f32 %v368, %v375
  %v377 = vsub.f32 %v353, %v376
  %379 = vset.pattern.permute.xlu0 0
  %380 = vperm.xlu0 %379, %v375
  %v381 = vpop.permute.xlu0 %380
  %v383 = vmul.f32 %v277, %v381
  %v384 = vmul.f32 %v279, %v381
  %v385 = vmul.f32 %v348, %v381
  %v386 = vmul.f32 %v350, %v381
  %388 = vset.pattern.permute.xlu0 0
  %389 = vperm.xlu0 %388, %v377
  %v390 = vpop.permute.xlu0 %389
  %v392 = vadd.f32 %v383, %v390
  %v393 = vadd.f32 %v384, %v390
  %v394 = vadd.f32 %v385, %v390
  %v395 = vadd.f32 %v386, %v390
  %v396 = vmax.f32 %v392, 0.0
  %v397 = vmax.f32 %v393, 0.0
  %v398 = vmax.f32 %v394, 0.0
  %v399 = vmax.f32 %v395, 0.0
  %400 = vst [vmem:[%s7] sm:$0xff] %v396
  %401 = vst [vmem:[%s7 + $0x8] sm:$0xff] %v397
  %402 = vst [vmem:[%s7 + $0x10] sm:$0xff] %v398
  %403 = vst [vmem:[%s7 + $0x18] sm:$0xff] %v399
  // Predicated region
  $region30: #{depthwise_separable_block.1} parent=0 // pred_check
    _
  $region31: #{depthwise_separable_block.1} parent=0 // pred_check_branch
    %405 = sbr.rel (0) target = $region33
  $region32: #{depthwise_separable_block.1} parent=0 // pred_region
    _
  $region33: #{depthwise_separable_block.1} parent=0 // pred_fallthru
    _
  // Predicated region
  $region34: #{depthwise_separable_block.1} parent=0 // pred_check
    _
  $region35: #{depthwise_separable_block.1} parent=0 // pred_check_branch
    %407 = sbr.rel (0) target = $region37
  $region36: #{depthwise_separable_block.1} parent=0 // pred_region
    _
  $region37: #{depthwise_separable_block.1} parent=0 // pred_fallthru
    _

</llo_original>
